<compile_context>
chip_gen: v7x
topology: tpu7x:2x2x1
jax: 0.10.0
libtpu: 0.0.40
codegen_flags: <defaults>
</compile_context>

<pallas_src>
import functools

import jax
import jax.numpy as jnp
from jax.experimental import pallas as pl
from jax.experimental.pallas import tpu as pltpu


def _round_up(x, m):
    return ((x + m - 1) // m) * m


def _critic_kernel(obs_ref, w1_ref, b1_ref, w2_ref, b2_ref, w3_ref, b3_ref,
                   out_ref):
    """One batch tile of the fused 3-layer MLP forward.

    obs_ref: (TB, 64) bf16     w1_ref: (64, 256) bf16    b1_ref: (1, 256) f32
    w2_ref: (256, 256) bf16    b2_ref: (1, 256) f32
    w3_ref: (1, 256) f32       b3_ref: (1, 1) f32        out_ref: (TB, 1) f32
    """
    # Layer 1: bf16 MXU matmul, f32 accumulate, f32 bias + ReLU on the VPU.
    h1 = jnp.dot(obs_ref[...], w1_ref[...],
                 preferred_element_type=jnp.float32)
    h1 = jnp.maximum(h1 + b1_ref[...], 0.0)

    # Layer 2: dominant matmul -> bf16 inputs, f32 accumulate.
    h2 = jnp.dot(h1.astype(jnp.bfloat16), w2_ref[...],
                 preferred_element_type=jnp.float32)
    h2 = jnp.maximum(h2 + b2_ref[...], 0.0)

    # Layer 3 (256 -> 1): VPU broadcast-multiply + lane reduction instead of
    # an N=1 MXU matmul (keeps the MXU free between tiles).
    val = jnp.sum(h2 * w3_ref[...], axis=-1, keepdims=True) + b3_ref[...]
    out_ref[...] = val.astype(out_ref.dtype)


@functools.partial(jax.jit, static_argnames=("block_b",))
def critic_forward(obs, w1, b1, w2, b2, w3, b3, *, block_b=1024):
    """Pallas wrapper. Returns a 1-tuple (value,) like the torch module.

    obs: (B, 60) f32; w* stored transposed vs. torch, i.e. (in, out).
    """
    B, K = obs.shape
    H = w1.shape[1]                 # 256
    KP = _round_up(K, 64)           # pad feature dim 60 -> 64

    # Pad K (zero columns of obs / zero rows of w1 -> identical math).
    obs_p = jnp.pad(obs, ((0, 0), (0, KP - K))) if KP != K else obs
    w1_p = jnp.pad(w1, ((0, KP - K), (0, 0))) if KP != K else w1

    # Pick a batch tile (multiple of 128) and zero-pad B up to a tile multiple.
    TB = min(block_b, _round_up(B, 128))
    B_pad = _round_up(B, TB)
    if B_pad != B:
        obs_p = jnp.pad(obs_p, ((0, B_pad - B), (0, 0)))

    # bf16 operands for the MXU (accumulation stays f32 inside the kernel).
    obs_b = obs_p.astype(jnp.bfloat16)
    w1_b = w1_p.astype(jnp.bfloat16)
    w2_b = w2.astype(jnp.bfloat16)
    w3_r = w3.reshape(1, H).astype(jnp.float32)   # (256,1) -> (1,256), VPU path

    grid = (B_pad // TB,)
    const = lambda i: (0, 0)        # weights/biases: DMA once, stay resident

    value = pl.pallas_call(
        _critic_kernel,
        out_shape=jax.ShapeDtypeStruct((B_pad, 1), jnp.float32),
        grid=grid,
        in_specs=[
            pl.BlockSpec((TB, KP), lambda i: (i, 0)),   # obs tile
            pl.BlockSpec((KP, H), const),               # w1
            pl.BlockSpec((1, H), const),                # b1
            pl.BlockSpec((H, H), const),                # w2
            pl.BlockSpec((1, H), const),                # b2
            pl.BlockSpec((1, H), const),                # w3 (row vector)
            pl.BlockSpec((1, 1), const),                # b3
        ],
        out_specs=pl.BlockSpec((TB, 1), lambda i: (i, 0)),
        compiler_params=pltpu.CompilerParams(
            dimension_semantics=("parallel",)),
    )(obs_b, w1_b, b1, w2_b, b2, w3_r, b3)

    return (value[:B],)


def init_critic_params(key):
    """Deterministic init mimicking torch.nn.Linear defaults:
    U(-1/sqrt(fan_in), 1/sqrt(fan_in)) for weights and biases.
    Weights stored as (in_features, out_features)."""
    dims = [(60, 256), (256, 256), (256, 1)]
    params = []
    for (fan_in, fan_out) in dims:
        key, kw, kb = jax.random.split(key, 3)
        bound = 1.0 / jnp.sqrt(float(fan_in))
        w = jax.random.uniform(kw, (fan_in, fan_out), jnp.float32,
                               minval=-bound, maxval=bound)
        b = jax.random.uniform(kb, (1, fan_out), jnp.float32,
                               minval=-bound, maxval=bound)
        params.extend([w, b])
    return tuple(params)


def _reference(obs, w1, b1, w2, b2, w3, b3):
    h1 = jnp.maximum(obs @ w1 + b1, 0.0)
    h2 = jnp.maximum(h1 @ w2 + b2, 0.0)
    return h2 @ w3 + b3


if __name__ == "__main__":
    key = jax.random.PRNGKey(0)
    key, k_obs, k_obs2 = jax.random.split(key, 3)
    w1, b1, w2, b2, w3, b3 = init_critic_params(key)

    # Small toy batch (matches module usage).
    batch = 8
    obs = jax.random.normal(k_obs, (batch, 60), jnp.float32)
    (value,) = critic_forward(obs, w1, b1, w2, b2, w3, b3)
    value = jax.block_until_ready(value)
    ref = _reference(obs, w1, b1, w2, b2, w3, b3)
    assert value.shape == (batch, 1)
    # bf16 MXU inputs (f32 accumulate) -> slightly looser tolerance.
    assert jnp.allclose(value, ref, atol=2e-2, rtol=2e-2)

    # Non-multiple batch exercising the multi-tile grid + padding path.
    batch2 = 300
    obs2 = jax.random.normal(k_obs2, (batch2, 60), jnp.float32)
    (value2,) = critic_forward(obs2, w1, b1, w2, b2, w3, b3, block_b=128)
    value2 = jax.block_until_ready(value2)
    ref2 = _reference(obs2, w1, b1, w2, b2, w3, b3)
    assert value2.shape == (batch2, 1)
    assert jnp.allclose(value2, ref2, atol=2e-2, rtol=2e-2)

    print("KERNEL_OK")
</pallas_src>

<mosaic_0001>
module attributes {stable_mosaic.version = 11 : i64} {
  func.func @_critic_kernel(%arg0: i32, %arg1: memref<128x64xbf16, #tpu.memory_space<vmem>>, %arg2: memref<64x256xbf16, #tpu.memory_space<vmem>>, %arg3: memref<1x256xf32, #tpu.memory_space<vmem>>, %arg4: memref<256x256xbf16, #tpu.memory_space<vmem>>, %arg5: memref<1x256xf32, #tpu.memory_space<vmem>>, %arg6: memref<1x256xf32, #tpu.memory_space<vmem>>, %arg7: memref<1x1xf32, #tpu.memory_space<vmem>>, %arg8: memref<128x1xf32, #tpu.memory_space<vmem>>) attributes {dimension_semantics = [#tpu.dimension_semantics<parallel>], iteration_bounds = array<i64: 1>, scalar_prefetch = 0 : i64, scratch_operands = 0 : i64, tpu.core_type = #tpu.core_type<tc>, window_params = [{transform_indices = @transform_0, window_bounds = array<i64: 128, 64>}, {pipeline_mode = #tpu.pipeline_mode<synchronous>, transform_indices = @transform_1, window_bounds = array<i64: 64, 256>}, {pipeline_mode = #tpu.pipeline_mode<synchronous>, transform_indices = @transform_2, window_bounds = array<i64: 1, 256>}, {pipeline_mode = #tpu.pipeline_mode<synchronous>, transform_indices = @transform_3, window_bounds = array<i64: 256, 256>}, {pipeline_mode = #tpu.pipeline_mode<synchronous>, transform_indices = @transform_4, window_bounds = array<i64: 1, 256>}, {pipeline_mode = #tpu.pipeline_mode<synchronous>, transform_indices = @transform_5, window_bounds = array<i64: 1, 256>}, {pipeline_mode = #tpu.pipeline_mode<synchronous>, transform_indices = @transform_6, window_bounds = array<i64: 1, 1>}, {transform_indices = @transform_7, window_bounds = array<i64: 128, 1>}]} {
    %c0 = arith.constant 0 : index
    %c0_0 = arith.constant 0 : index
    %0 = vector.load %arg1[%c0, %c0_0] : memref<128x64xbf16, #tpu.memory_space<vmem>>, vector<128x64xbf16>
    %c0_1 = arith.constant 0 : index
    %c0_2 = arith.constant 0 : index
    %1 = vector.load %arg2[%c0_1, %c0_2] : memref<64x256xbf16, #tpu.memory_space<vmem>>, vector<64x256xbf16>
    %cst = arith.constant dense<0.000000e+00> : vector<128x256xf32>
    %2 = tpu.matmul %0, %1, %cst {dimension_numbers = #tpu.dot_dimension_numbers<[1], [0], [0], [1], [0, 0, 1, 1], [], []>} : vector<128x64xbf16>, vector<64x256xbf16>, vector<128x256xf32> -> vector<128x256xf32>
    %c0_3 = arith.constant 0 : index
    %c0_4 = arith.constant 0 : index
    %3 = vector.load %arg3[%c0_3, %c0_4] : memref<1x256xf32, #tpu.memory_space<vmem>>, vector<1x256xf32>
    %4 = vector.broadcast %3 : vector<1x256xf32> to vector<128x256xf32>
    %5 = arith.addf %2, %4 : vector<128x256xf32>
    %cst_5 = arith.constant 0.000000e+00 : f32
    %6 = vector.broadcast %cst_5 : f32 to vector<128x256xf32>
    %7 = arith.maximumf %5, %6 : vector<128x256xf32>
    %8 = arith.truncf %7 : vector<128x256xf32> to vector<128x256xbf16>
    %c0_6 = arith.constant 0 : index
    %c0_7 = arith.constant 0 : index
    %9 = vector.load %arg4[%c0_6, %c0_7] : memref<256x256xbf16, #tpu.memory_space<vmem>>, vector<256x256xbf16>
    %cst_8 = arith.constant dense<0.000000e+00> : vector<128x256xf32>
    %10 = tpu.matmul %8, %9, %cst_8 {dimension_numbers = #tpu.dot_dimension_numbers<[1], [0], [0], [1], [0, 0, 1, 1], [], []>} : vector<128x256xbf16>, vector<256x256xbf16>, vector<128x256xf32> -> vector<128x256xf32>
    %c0_9 = arith.constant 0 : index
    %c0_10 = arith.constant 0 : index
    %11 = vector.load %arg5[%c0_9, %c0_10] : memref<1x256xf32, #tpu.memory_space<vmem>>, vector<1x256xf32>
    %12 = vector.broadcast %11 : vector<1x256xf32> to vector<128x256xf32>
    %13 = arith.addf %10, %12 : vector<128x256xf32>
    %cst_11 = arith.constant 0.000000e+00 : f32
    %14 = vector.broadcast %cst_11 : f32 to vector<128x256xf32>
    %15 = arith.maximumf %13, %14 : vector<128x256xf32>
    %c0_12 = arith.constant 0 : index
    %c0_13 = arith.constant 0 : index
    %16 = vector.load %arg6[%c0_12, %c0_13] : memref<1x256xf32, #tpu.memory_space<vmem>>, vector<1x256xf32>
    %17 = vector.broadcast %16 : vector<1x256xf32> to vector<128x256xf32>
    %18 = arith.mulf %15, %17 : vector<128x256xf32>
    %cst_14 = arith.constant dense<0.000000e+00> : vector<128xf32>
    %19 = vector.multi_reduction <add>, %18, %cst_14 [1] : vector<128x256xf32> to vector<128xf32>
    %20 = vector.shape_cast %19 : vector<128xf32> to vector<128x1xf32>
    %c0_15 = arith.constant 0 : index
    %c0_16 = arith.constant 0 : index
    %21 = vector.load %arg7[%c0_15, %c0_16] : memref<1x1xf32, #tpu.memory_space<vmem>>, vector<1x1xf32>
    %22 = vector.broadcast %21 : vector<1x1xf32> to vector<128x1xf32>
    %23 = arith.addf %20, %22 : vector<128x1xf32>
    %c0_17 = arith.constant 0 : index
    %c0_18 = arith.constant 0 : index
    %24 = vector.load %arg8[%c0_17, %c0_18] : memref<128x1xf32, #tpu.memory_space<vmem>>, vector<128x1xf32>
    tpu.vector_store %arg8[%c0_17, %c0_18], %23 {strides = array<i32>} : memref<128x1xf32, #tpu.memory_space<vmem>>, vector<128x1xf32>,
    return
  }
  func.func @transform_0(%arg0: i32) -> (i32, i32) {
    %c0_i32 = arith.constant 0 : i32
    %c0_i32_0 = arith.constant 0 : i32
    return %arg0, %c0_i32 : i32, i32
  }
  func.func @transform_1(%arg0: i32) -> (i32, i32) {
    %c0_i32 = arith.constant 0 : i32
    %c0_i32_0 = arith.constant 0 : i32
    %c0_i32_1 = arith.constant 0 : i32
    return %c0_i32, %c0_i32_0 : i32, i32
  }
  func.func @transform_2(%arg0: i32) -> (i32, i32) {
    %c0_i32 = arith.constant 0 : i32
    %c0_i32_0 = arith.constant 0 : i32
    %c0_i32_1 = arith.constant 0 : i32
    return %c0_i32, %c0_i32_0 : i32, i32
  }
  func.func @transform_3(%arg0: i32) -> (i32, i32) {
    %c0_i32 = arith.constant 0 : i32
    %c0_i32_0 = arith.constant 0 : i32
    %c0_i32_1 = arith.constant 0 : i32
    return %c0_i32, %c0_i32_0 : i32, i32
  }
  func.func @transform_4(%arg0: i32) -> (i32, i32) {
    %c0_i32 = arith.constant 0 : i32
    %c0_i32_0 = arith.constant 0 : i32
    %c0_i32_1 = arith.constant 0 : i32
    return %c0_i32, %c0_i32_0 : i32, i32
  }
  func.func @transform_5(%arg0: i32) -> (i32, i32) {
    %c0_i32 = arith.constant 0 : i32
    %c0_i32_0 = arith.constant 0 : i32
    %c0_i32_1 = arith.constant 0 : i32
    return %c0_i32, %c0_i32_0 : i32, i32
  }
  func.func @transform_6(%arg0: i32) -> (i32, i32) {
    %c0_i32 = arith.constant 0 : i32
    %c0_i32_0 = arith.constant 0 : i32
    %c0_i32_1 = arith.constant 0 : i32
    return %c0_i32, %c0_i32_0 : i32, i32
  }
  func.func @transform_7(%arg0: i32) -> (i32, i32) {
    %c0_i32 = arith.constant 0 : i32
    %c0_i32_0 = arith.constant 0 : i32
    return %arg0, %c0_i32 : i32, i32
  }
}

</mosaic_0001>

<llo_original>
// kernel: critic_forward.1
$region0: #{critic_forward.1}
  #allocation0 [shape = 'u32[]', space=smem, size = 0x4, offset = 0x4, fixed_abs, tag = 'smem constant byte address 0x4 - core index']
  #allocation1 [shape = 'u32[144,128]{1,0:T(1,128)}', space=vmem, size = 0x12000, scoped, tag = 'internal scratch']
  #allocation2 [shape = 'f32[1,1]{1,0:T(1,128)S(1)}', space=vmem, size = 0x200, scoped, tag = 'scoped memory for critic_forward.1']
  %s0 = inlined_call_operand.vmem [shape: bf16[128,64], index: 0, kind: input, shape index: {}]
  %s1 = inlined_call_operand.vmem [shape: bf16[64,256], index: 1, kind: input, shape index: {}]
  %s2 = inlined_call_operand.vmem [shape: f32[1,256], index: 2, kind: input, shape index: {}]
  %s3 = inlined_call_operand.vmem [shape: bf16[256,256], index: 3, kind: input, shape index: {}]
  %s4 = inlined_call_operand.vmem [shape: f32[1,256], index: 4, kind: input, shape index: {}]
  %s5 = inlined_call_operand.vmem [shape: f32[1,256], index: 5, kind: input, shape index: {}]
  %s6 = inlined_call_operand.<no memory space> [shape: f32[1,1], index: 6, kind: input, shape index: {}]
  %s7 = inlined_call_operand.vmem [shape: f32[128,1], index: 7, kind: output, shape index: {}]
  %s8 = sld [smem:[#allocation0]]
  $region38: #{critic_forward.1} parent=0
    _
  %s10 = ssub.s32 1, %s8
  %s11 = scalar_select 0, %s10, %s8
  %v12 = vstv %s6
  %13 = vst [vmem:[#allocation2] sm:$0x1] %v12
  // Predicated region
  $region2: #{critic_forward.1} parent=0 // pred_check
    _
  $region3: #{critic_forward.1} parent=0 // pred_check_branch
    %15 = sbr.rel (0) target = $region5
  $region4: #{critic_forward.1} parent=0 // pred_region
    _
  $region5: #{critic_forward.1} parent=0 // pred_fallthru
    _
  // Predicated region
  $region6: #{critic_forward.1} parent=0 // pred_check
    _
  $region7: #{critic_forward.1} parent=0 // pred_check_branch
    %17 = sbr.rel (0) target = $region9
  $region8: #{critic_forward.1} parent=0 // pred_region
    _
  $region9: #{critic_forward.1} parent=0 // pred_fallthru
    _
  // Predicated region
  $region10: #{critic_forward.1} parent=0 // pred_check
    _
  $region11: #{critic_forward.1} parent=0 // pred_check_branch
    %19 = sbr.rel (0) target = $region13
  $region12: #{critic_forward.1} parent=0 // pred_region
    _
  $region13: #{critic_forward.1} parent=0 // pred_fallthru
    _
  // Predicated region
  $region14: #{critic_forward.1} parent=0 // pred_check
    _
  $region15: #{critic_forward.1} parent=0 // pred_check_branch
    %21 = sbr.rel (0) target = $region17
  $region16: #{critic_forward.1} parent=0 // pred_region
    _
  $region17: #{critic_forward.1} parent=0 // pred_fallthru
    _
  // Predicated region
  $region18: #{critic_forward.1} parent=0 // pred_check
    _
  $region19: #{critic_forward.1} parent=0 // pred_check_branch
    %23 = sbr.rel (0) target = $region21
  $region20: #{critic_forward.1} parent=0 // pred_region
    _
  $region21: #{critic_forward.1} parent=0 // pred_fallthru
    _
  // Predicated region
  $region22: #{critic_forward.1} parent=0 // pred_check
    _
  $region23: #{critic_forward.1} parent=0 // pred_check_branch
    %25 = sbr.rel (0) target = $region25
  $region24: #{critic_forward.1} parent=0 // pred_region
    _
  $region25: #{critic_forward.1} parent=0 // pred_fallthru
    _
  // Predicated region
  $region26: #{critic_forward.1} parent=0 // pred_check
    _
  $region27: #{critic_forward.1} parent=0 // pred_check_branch
    %27 = sbr.rel (0) target = $region29
  $region28: #{critic_forward.1} parent=0 // pred_region
    _
  $region29: #{critic_forward.1} parent=0 // pred_fallthru
    _
  %v29 = vld [vmem:[%s0] sm:$0xf]
  %v30 = vld [vmem:[%s0 + $0x4] sm:$0xf]
  %v31 = vld [vmem:[%s0 + $0x8] sm:$0xf]
  %v32 = vld [vmem:[%s0 + $0xc] sm:$0xf]
  %v33 = vld [vmem:[%s0 + $0x10] sm:$0xf]
  %v34 = vld [vmem:[%s0 + $0x14] sm:$0xf]
  %v35 = vld [vmem:[%s0 + $0x18] sm:$0xf]
  %v36 = vld [vmem:[%s0 + $0x1c] sm:$0xf]
  %v37 = vld [vmem:[%s0 + $0x20] sm:$0xf]
  %v38 = vld [vmem:[%s0 + $0x24] sm:$0xf]
  %v39 = vld [vmem:[%s0 + $0x28] sm:$0xf]
  %v40 = vld [vmem:[%s0 + $0x2c] sm:$0xf]
  %v41 = vld [vmem:[%s0 + $0x30] sm:$0xf]
  %v42 = vld [vmem:[%s0 + $0x34] sm:$0xf]
  %v43 = vld [vmem:[%s0 + $0x38] sm:$0xf]
  %v44 = vld [vmem:[%s0 + $0x3c] sm:$0xf]
  %v45 = vld [vmem:[%s1] sm:$0xff]
  %v46 = vld [vmem:[%s1 + $0x8] sm:$0xff]
  %v47 = vld [vmem:[%s1 + $0x10] sm:$0xff]
  %v48 = vld [vmem:[%s1 + $0x18] sm:$0xff]
  %v49 = vld [vmem:[%s1 + $0x20] sm:$0xff]
  %v50 = vld [vmem:[%s1 + $0x28] sm:$0xff]
  %v51 = vld [vmem:[%s1 + $0x30] sm:$0xff]
  %v52 = vld [vmem:[%s1 + $0x38] sm:$0xff]
  %v53 = vld [vmem:[%s2] sm:$0x3]
  %v55 = vlaneseq
  %v56 = vshrl.u32 %v55, 7
  %v57 = vsub.s32 0, %v56
  %v58 = vrot.slane %v53, %v57
  %v59 = vlaneseq
  %v60 = vshrl.u32 %v59, 7
  %v61 = vsub.s32 1, %v60
  %v62 = vrot.slane %v53, %v61
  %v81 = vunpack.c.l.b16 %v29
  %v82 = vunpack.c.l.b16 %v30
  %v83 = vunpack.c.l.b16 %v31
  %v84 = vunpack.c.l.b16 %v32
  %v85 = vunpack.c.l.b16 %v33
  %v86 = vunpack.c.l.b16 %v34
  %v87 = vunpack.c.l.b16 %v35
  %v88 = vunpack.c.l.b16 %v36
  %v89 = vunpack.c.l.b16 %v37
  %v90 = vunpack.c.l.b16 %v38
  %v91 = vunpack.c.l.b16 %v39
  %v92 = vunpack.c.l.b16 %v40
  %v93 = vunpack.c.l.b16 %v41
  %v94 = vunpack.c.l.b16 %v42
  %v95 = vunpack.c.l.b16 %v43
  %v96 = vunpack.c.l.b16 %v44
  %v97 = vpack.c.b16 %v82, %v81
  %v98 = vpack.c.b16 %v84, %v83
  %v99 = vpack.c.b16 %v86, %v85
  %v100 = vpack.c.b16 %v88, %v87
  %v101 = vpack.c.b16 %v90, %v89
  %v102 = vpack.c.b16 %v92, %v91
  %v103 = vpack.c.b16 %v94, %v93
  %v104 = vpack.c.b16 %v96, %v95
  %v113 = vunpack.c.l.b16 %v45
  %v114 = vunpack.c.h.b16 %v45
  %v115 = vunpack.c.l.b16 %v46
  %v116 = vunpack.c.h.b16 %v46
  %v117 = vunpack.c.l.b16 %v47
  %v118 = vunpack.c.h.b16 %v47
  %v119 = vunpack.c.l.b16 %v48
  %v120 = vunpack.c.h.b16 %v48
  %v121 = vunpack.c.l.b16 %v49
  %v122 = vunpack.c.h.b16 %v49
  %v123 = vunpack.c.l.b16 %v50
  %v124 = vunpack.c.h.b16 %v50
  %v125 = vunpack.c.l.b16 %v51
  %v126 = vunpack.c.h.b16 %v51
  %v127 = vunpack.c.l.b16 %v52
  %v128 = vunpack.c.h.b16 %v52
  %v129 = vpack.c.b16 %v115, %v113
  %v130 = vpack.c.b16 %v116, %v114
  %v131 = vpack.c.b16 %v119, %v117
  %v132 = vpack.c.b16 %v120, %v118
  %v133 = vpack.c.b16 %v123, %v121
  %v134 = vpack.c.b16 %v124, %v122
  %v135 = vpack.c.b16 %v127, %v125
  %v136 = vpack.c.b16 %v128, %v126
  %vm145 = vcmask 523264
  %v147 = vsel %vm145, %v97, 0
  %v150 = vsel %vm145, %v98, 0
  %v153 = vsel %vm145, %v99, 0
  %v156 = vsel %vm145, %v100, 0
  %v159 = vsel %vm145, %v101, 0
  %v162 = vsel %vm145, %v102, 0
  %v165 = vsel %vm145, %v103, 0
  %v168 = vsel %vm145, %v104, 0
  %170 = vmatprep.subr.bf16.mxu0 %v130
  %171 = vmatpush1.bf16.msra.mxu0 %v129
  %172 = vmatprep.subr.bf16.mxu0 %v132
  %173 = vmatpush1.bf16.msra.mxu0 %v131
  %174 = vmatprep.subr.bf16.mxu0 %v134
  %175 = vmatpush1.bf16.msra.mxu0 %v133
  %176 = vmatprep.subr.bf16.mxu0 %v136
  %177 = vmatpush1.bf16.msra.mxu0 %v135
  %178 = vmatprep.subr.bf16.mxu0 0
  %179 = vmatpush1.bf16.msra.mxu0 0
  %180 = vmatprep.subr.bf16.mxu0 0
  %181 = vmatpush1.bf16.msra.mxu0 0
  %182 = vmatprep.subr.bf16.mxu0 0
  %183 = vmatpush1.bf16.msra.mxu0 0
  %184 = vmatprep.subr.bf16.mxu0 0
  %185 = vmatpush1.bf16.msra.mxu0 0
  %186 = vmatprep.subr.bf16.mxu0 0
  %187 = vmatpush1.bf16.msra.mxu0 0
  %188 = vmatprep.subr.bf16.mxu0 0
  %189 = vmatpush1.bf16.msra.mxu0 0
  %190 = vmatprep.subr.bf16.mxu0 0
  %191 = vmatpush1.bf16.msra.mxu0 0
  %192 = vmatprep.subr.bf16.mxu0 0
  %193 = vmatpush1.bf16.msra.mxu0 0
  %194 = vmatprep.subr.bf16.mxu0 0
  %195 = vmatpush1.bf16.msra.mxu0 0
  %196 = vmatprep.subr.bf16.mxu0 0
  %197 = vmatpush1.bf16.msra.mxu0 0
  %198 = vmatprep.subr.bf16.mxu0 0
  %199 = vmatpush1.bf16.msra.mxu0 0
  %200 = vmatprep.subr.bf16.mxu0 0
  %201 = vmatpush1.bf16.msra.mxu0 0
  %202 = vmatprep.mubr.bf16.mxu0 0
  %203 = vmatmul.mubr.bf16.gmra.mrb[0].mxu0 %v147
  %v204 = vpop.f32.mrb[0].mxu0
  %v205 = vadd.f32 %v58, %v204
  %v206 = vpop.f32.mrb[0].mxu0
  %v207 = vadd.f32 %v62, %v206
  %v208 = vpop.f32.mrb[0].mxu0
  %v209 = vadd.f32 %v58, %v208
  %v210 = vpop.f32.mrb[0].mxu0
  %v211 = vadd.f32 %v62, %v210
  %212 = vmatprep.mubr.bf16.mxu0 0
  %213 = vmatmul.mubr.bf16.gmra.mrb[0].mxu0 %v150
  %v214 = vpop.f32.mrb[0].mxu0
  %v215 = vadd.f32 %v58, %v214
  %v216 = vpop.f32.mrb[0].mxu0
  %v217 = vadd.f32 %v62, %v216
  %v218 = vpop.f32.mrb[0].mxu0
  %v219 = vadd.f32 %v58, %v218
  %v220 = vpop.f32.mrb[0].mxu0
  %v221 = vadd.f32 %v62, %v220
  %222 = vmatprep.mubr.bf16.mxu0 0
  %223 = vmatmul.mubr.bf16.gmra.mrb[0].mxu0 %v153
  %v224 = vpop.f32.mrb[0].mxu0
  %v225 = vadd.f32 %v58, %v224
  %v226 = vpop.f32.mrb[0].mxu0
  %v227 = vadd.f32 %v62, %v226
  %v228 = vpop.f32.mrb[0].mxu0
  %v229 = vadd.f32 %v58, %v228
  %v230 = vpop.f32.mrb[0].mxu0
  %v231 = vadd.f32 %v62, %v230
  %232 = vmatprep.mubr.bf16.mxu0 0
  %233 = vmatmul.mubr.bf16.gmra.mrb[0].mxu0 %v156
  %v234 = vpop.f32.mrb[0].mxu0
  %v235 = vadd.f32 %v58, %v234
  %v236 = vpop.f32.mrb[0].mxu0
  %v237 = vadd.f32 %v62, %v236
  %v238 = vpop.f32.mrb[0].mxu0
  %v239 = vadd.f32 %v58, %v238
  %v240 = vpop.f32.mrb[0].mxu0
  %v241 = vadd.f32 %v62, %v240
  %242 = vmatprep.mubr.bf16.mxu0 0
  %243 = vmatmul.mubr.bf16.gmra.mrb[0].mxu0 %v159
  %v244 = vpop.f32.mrb[0].mxu0
  %v245 = vadd.f32 %v58, %v244
  %v246 = vpop.f32.mrb[0].mxu0
  %v247 = vadd.f32 %v62, %v246
  %v248 = vpop.f32.mrb[0].mxu0
  %v249 = vadd.f32 %v58, %v248
  %v250 = vpop.f32.mrb[0].mxu0
  %v251 = vadd.f32 %v62, %v250
  %252 = vmatprep.mubr.bf16.mxu0 0
  %253 = vmatmul.mubr.bf16.gmra.mrb[0].mxu0 %v162
  %v254 = vpop.f32.mrb[0].mxu0
  %v255 = vadd.f32 %v58, %v254
  %v256 = vpop.f32.mrb[0].mxu0
  %v257 = vadd.f32 %v62, %v256
  %v258 = vpop.f32.mrb[0].mxu0
  %v259 = vadd.f32 %v58, %v258
  %v260 = vpop.f32.mrb[0].mxu0
  %v261 = vadd.f32 %v62, %v260
  %262 = vmatprep.mubr.bf16.mxu0 0
  %263 = vmatmul.mubr.bf16.gmra.mrb[0].mxu0 %v165
  %v264 = vpop.f32.mrb[0].mxu0
  %v265 = vadd.f32 %v58, %v264
  %v266 = vpop.f32.mrb[0].mxu0
  %v267 = vadd.f32 %v62, %v266
  %v268 = vpop.f32.mrb[0].mxu0
  %v269 = vadd.f32 %v58, %v268
  %v270 = vpop.f32.mrb[0].mxu0
  %v271 = vadd.f32 %v62, %v270
  %272 = vmatprep.mubr.bf16.mxu0 0
  %273 = vmatmul.mubr.bf16.gmra.mrb[0].mxu0 %v168
  %v274 = vpop.f32.mrb[0].mxu0
  %v275 = vadd.f32 %v58, %v274
  %v276 = vpop.f32.mrb[0].mxu0
  %v277 = vadd.f32 %v62, %v276
  %v278 = vpop.f32.mrb[0].mxu0
  %v279 = vadd.f32 %v58, %v278
  %v280 = vpop.f32.mrb[0].mxu0
  %v281 = vadd.f32 %v62, %v280
  %282 = vdwg.mxu0
  %v283 = vmax.f32 %v205, 0.0
  %v284 = vmax.f32 %v207, 0.0
  %v285 = vmax.f32 %v209, 0.0
  %v286 = vmax.f32 %v211, 0.0
  %v287 = vmax.f32 %v215, 0.0
  %v288 = vmax.f32 %v217, 0.0
  %v289 = vmax.f32 %v219, 0.0
  %v290 = vmax.f32 %v221, 0.0
  %v291 = vmax.f32 %v225, 0.0
  %v292 = vmax.f32 %v227, 0.0
  %v293 = vmax.f32 %v229, 0.0
  %v294 = vmax.f32 %v231, 0.0
  %v295 = vmax.f32 %v235, 0.0
  %v296 = vmax.f32 %v237, 0.0
  %v297 = vmax.f32 %v239, 0.0
  %v298 = vmax.f32 %v241, 0.0
  %v299 = vmax.f32 %v245, 0.0
  %v300 = vmax.f32 %v247, 0.0
  %v301 = vmax.f32 %v249, 0.0
  %v302 = vmax.f32 %v251, 0.0
  %v303 = vmax.f32 %v255, 0.0
  %v304 = vmax.f32 %v257, 0.0
  %v305 = vmax.f32 %v259, 0.0
  %v306 = vmax.f32 %v261, 0.0
  %v307 = vmax.f32 %v265, 0.0
  %v308 = vmax.f32 %v267, 0.0
  %v309 = vmax.f32 %v269, 0.0
  %v310 = vmax.f32 %v271, 0.0
  %v311 = vmax.f32 %v275, 0.0
  %v312 = vmax.f32 %v277, 0.0
  %v313 = vmax.f32 %v279, 0.0
  %v314 = vmax.f32 %v281, 0.0
  %v315 = vpack.c.bf16 %v285, %v283
  %v316 = vpack.c.bf16 %v286, %v284
  %v317 = vpack.c.bf16 %v289, %v287
  %v318 = vpack.c.bf16 %v290, %v288
  %v319 = vpack.c.bf16 %v293, %v291
  %v320 = vpack.c.bf16 %v294, %v292
  %v321 = vpack.c.bf16 %v297, %v295
  %v322 = vpack.c.bf16 %v298, %v296
  %v323 = vpack.c.bf16 %v301, %v299
  %v324 = vpack.c.bf16 %v302, %v300
  %v325 = vpack.c.bf16 %v305, %v303
  %v326 = vpack.c.bf16 %v306, %v304
  %v327 = vpack.c.bf16 %v309, %v307
  %v328 = vpack.c.bf16 %v310, %v308
  %v329 = vpack.c.bf16 %v313, %v311
  %v330 = vpack.c.bf16 %v314, %v312
  %v331 = vld [vmem:[%s3] sm:$0xff]
  %v332 = vld [vmem:[%s3 + $0x8] sm:$0xff]
  %v333 = vld [vmem:[%s3 + $0x10] sm:$0xff]
  %v334 = vld [vmem:[%s3 + $0x18] sm:$0xff]
  %v335 = vld [vmem:[%s3 + $0x20] sm:$0xff]
  %v336 = vld [vmem:[%s3 + $0x28] sm:$0xff]
  %v337 = vld [vmem:[%s3 + $0x30] sm:$0xff]
  %v338 = vld [vmem:[%s3 + $0x38] sm:$0xff]
  %v339 = vld [vmem:[%s3 + $0x40] sm:$0xff]
  %v340 = vld [vmem:[%s3 + $0x48] sm:$0xff]
  %v341 = vld [vmem:[%s3 + $0x50] sm:$0xff]
  %v342 = vld [vmem:[%s3 + $0x58] sm:$0xff]
  %v343 = vld [vmem:[%s3 + $0x60] sm:$0xff]
  %v344 = vld [vmem:[%s3 + $0x68] sm:$0xff]
  %v345 = vld [vmem:[%s3 + $0x70] sm:$0xff]
  %v346 = vld [vmem:[%s3 + $0x78] sm:$0xff]
  %v347 = vld [vmem:[%s3 + $0x80] sm:$0xff]
  %v348 = vld [vmem:[%s3 + $0x88] sm:$0xff]
  %v349 = vld [vmem:[%s3 + $0x90] sm:$0xff]
  %v350 = vld [vmem:[%s3 + $0x98] sm:$0xff]
  %v351 = vld [vmem:[%s3 + $0xa0] sm:$0xff]
  %v352 = vld [vmem:[%s3 + $0xa8] sm:$0xff]
  %v353 = vld [vmem:[%s3 + $0xb0] sm:$0xff]
  %v354 = vld [vmem:[%s3 + $0xb8] sm:$0xff]
  %v355 = vld [vmem:[%s3 + $0xc0] sm:$0xff]
  %v356 = vld [vmem:[%s3 + $0xc8] sm:$0xff]
  %v357 = vld [vmem:[%s3 + $0xd0] sm:$0xff]
  %v358 = vld [vmem:[%s3 + $0xd8] sm:$0xff]
  %v359 = vld [vmem:[%s3 + $0xe0] sm:$0xff]
  %v360 = vld [vmem:[%s3 + $0xe8] sm:$0xff]
  %v361 = vld [vmem:[%s3 + $0xf0] sm:$0xff]
  %v362 = vld [vmem:[%s3 + $0xf8] sm:$0xff]
  %v363 = vld [vmem:[%s4] sm:$0x3]
  %v365 = vlaneseq
  %v366 = vshrl.u32 %v365, 7
  %v367 = vsub.s32 0, %v366
  %v368 = vrot.slane %v363, %v367
  %v369 = vlaneseq
  %v370 = vshrl.u32 %v369, 7
  %v371 = vsub.s32 1, %v370
  %v372 = vrot.slane %v363, %v371
  %v407 = vunpack.c.l.b16 %v331
  %v408 = vunpack.c.h.b16 %v331
  %v409 = vunpack.c.l.b16 %v332
  %v410 = vunpack.c.h.b16 %v332
  %v411 = vunpack.c.l.b16 %v333
  %v412 = vunpack.c.h.b16 %v333
  %v413 = vunpack.c.l.b16 %v334
  %v414 = vunpack.c.h.b16 %v334
  %v415 = vunpack.c.l.b16 %v335
  %v416 = vunpack.c.h.b16 %v335
  %v417 = vunpack.c.l.b16 %v336
  %v418 = vunpack.c.h.b16 %v336
  %v419 = vunpack.c.l.b16 %v337
  %v420 = vunpack.c.h.b16 %v337
  %v421 = vunpack.c.l.b16 %v338
  %v422 = vunpack.c.h.b16 %v338
  %v423 = vunpack.c.l.b16 %v339
  %v424 = vunpack.c.h.b16 %v339
  %v425 = vunpack.c.l.b16 %v340
  %v426 = vunpack.c.h.b16 %v340
  %v427 = vunpack.c.l.b16 %v341
  %v428 = vunpack.c.h.b16 %v341
  %v429 = vunpack.c.l.b16 %v342
  %v430 = vunpack.c.h.b16 %v342
  %v431 = vunpack.c.l.b16 %v343
  %v432 = vunpack.c.h.b16 %v343
  %v433 = vunpack.c.l.b16 %v344
  %v434 = vunpack.c.h.b16 %v344
  %v435 = vunpack.c.l.b16 %v345
  %v436 = vunpack.c.h.b16 %v345
  %v437 = vunpack.c.l.b16 %v346
  %v438 = vunpack.c.h.b16 %v346
  %v439 = vunpack.c.l.b16 %v347
  %v440 = vunpack.c.h.b16 %v347
  %v441 = vunpack.c.l.b16 %v348
  %v442 = vunpack.c.h.b16 %v348
  %v443 = vunpack.c.l.b16 %v349
  %v444 = vunpack.c.h.b16 %v349
  %v445 = vunpack.c.l.b16 %v350
  %v446 = vunpack.c.h.b16 %v350
  %v447 = vunpack.c.l.b16 %v351
  %v448 = vunpack.c.h.b16 %v351
  %v449 = vunpack.c.l.b16 %v352
  %v450 = vunpack.c.h.b16 %v352
  %v451 = vunpack.c.l.b16 %v353
  %v452 = vunpack.c.h.b16 %v353
  %v453 = vunpack.c.l.b16 %v354
  %v454 = vunpack.c.h.b16 %v354
  %v455 = vunpack.c.l.b16 %v355
  %v456 = vunpack.c.h.b16 %v355
  %v457 = vunpack.c.l.b16 %v356
  %v458 = vunpack.c.h.b16 %v356
  %v459 = vunpack.c.l.b16 %v357
  %v460 = vunpack.c.h.b16 %v357
  %v461 = vunpack.c.l.b16 %v358
  %v462 = vunpack.c.h.b16 %v358
  %v463 = vunpack.c.l.b16 %v359
  %v464 = vunpack.c.h.b16 %v359
  %v465 = vunpack.c.l.b16 %v360
  %v466 = vunpack.c.h.b16 %v360
  %v467 = vunpack.c.l.b16 %v361
  %v468 = vunpack.c.h.b16 %v361
  %v469 = vunpack.c.l.b16 %v362
  %v470 = vunpack.c.h.b16 %v362
  %v471 = vpack.c.b16 %v409, %v407
  %v472 = vpack.c.b16 %v410, %v408
  %v473 = vpack.c.b16 %v413, %v411
  %v474 = vpack.c.b16 %v414, %v412
  %v475 = vpack.c.b16 %v417, %v415
  %v476 = vpack.c.b16 %v418, %v416
  %v477 = vpack.c.b16 %v421, %v419
  %v478 = vpack.c.b16 %v422, %v420
  %v479 = vpack.c.b16 %v425, %v423
  %v480 = vpack.c.b16 %v426, %v424
  %v481 = vpack.c.b16 %v429, %v427
  %v482 = vpack.c.b16 %v430, %v428
  %v483 = vpack.c.b16 %v433, %v431
  %v484 = vpack.c.b16 %v434, %v432
  %v485 = vpack.c.b16 %v437, %v435
  %v486 = vpack.c.b16 %v438, %v436
  %v487 = vpack.c.b16 %v441, %v439
  %v488 = vpack.c.b16 %v442, %v440
  %v489 = vpack.c.b16 %v445, %v443
  %v490 = vpack.c.b16 %v446, %v444
  %v491 = vpack.c.b16 %v449, %v447
  %v492 = vpack.c.b16 %v450, %v448
  %v493 = vpack.c.b16 %v453, %v451
  %v494 = vpack.c.b16 %v454, %v452
  %v495 = vpack.c.b16 %v457, %v455
  %v496 = vpack.c.b16 %v458, %v456
  %v497 = vpack.c.b16 %v461, %v459
  %v498 = vpack.c.b16 %v462, %v460
  %v499 = vpack.c.b16 %v465, %v463
  %v500 = vpack.c.b16 %v466, %v464
  %v501 = vpack.c.b16 %v469, %v467
  %v502 = vpack.c.b16 %v470, %v468
  %535 = vmatprep.subr.bf16.mxu0 %v472
  %536 = vmatpush1.bf16.msra.mxu0 %v471
  %537 = vmatprep.subr.bf16.mxu0 %v474
  %538 = vmatpush1.bf16.msra.mxu0 %v473
  %539 = vmatprep.subr.bf16.mxu0 %v476
  %540 = vmatpush1.bf16.msra.mxu0 %v475
  %541 = vmatprep.subr.bf16.mxu0 %v478
  %542 = vmatpush1.bf16.msra.mxu0 %v477
  %543 = vmatprep.subr.bf16.mxu0 %v480
  %544 = vmatpush1.bf16.msra.mxu0 %v479
  %545 = vmatprep.subr.bf16.mxu0 %v482
  %546 = vmatpush1.bf16.msra.mxu0 %v481
  %547 = vmatprep.subr.bf16.mxu0 %v484
  %548 = vmatpush1.bf16.msra.mxu0 %v483
  %549 = vmatprep.subr.bf16.mxu0 %v486
  %550 = vmatpush1.bf16.msra.mxu0 %v485
  %551 = vmatprep.subr.bf16.mxu0 %v488
  %552 = vmatpush1.bf16.msra.mxu0 %v487
  %553 = vmatprep.subr.bf16.mxu0 %v490
  %554 = vmatpush1.bf16.msra.mxu0 %v489
  %555 = vmatprep.subr.bf16.mxu0 %v492
  %556 = vmatpush1.bf16.msra.mxu0 %v491
  %557 = vmatprep.subr.bf16.mxu0 %v494
  %558 = vmatpush1.bf16.msra.mxu0 %v493
  %559 = vmatprep.subr.bf16.mxu0 %v496
  %560 = vmatpush1.bf16.msra.mxu0 %v495
  %561 = vmatprep.subr.bf16.mxu0 %v498
  %562 = vmatpush1.bf16.msra.mxu0 %v497
  %563 = vmatprep.subr.bf16.mxu0 %v500
  %564 = vmatpush1.bf16.msra.mxu0 %v499
  %565 = vmatprep.subr.bf16.mxu0 %v502
  %566 = vmatpush1.bf16.msra.mxu0 %v501
  %567 = vmatprep.mubr.bf16.mxu0 %v316
  %568 = vmatmul.mubr.bf16.gmra.mrb[0].mxu0 %v315
  %v569 = vpop.f32.mrb[0].mxu0
  %v570 = vadd.f32 %v368, %v569
  %v571 = vpop.f32.mrb[0].mxu0
  %v572 = vadd.f32 %v372, %v571
  %v573 = vpop.f32.mrb[0].mxu0
  %v574 = vadd.f32 %v368, %v573
  %v575 = vpop.f32.mrb[0].mxu0
  %v576 = vadd.f32 %v372, %v575
  %577 = vmatprep.mubr.bf16.mxu0 %v318
  %578 = vmatmul.mubr.bf16.gmra.mrb[0].mxu0 %v317
  %v579 = vpop.f32.mrb[0].mxu0
  %v580 = vadd.f32 %v368, %v579
  %v581 = vpop.f32.mrb[0].mxu0
  %v582 = vadd.f32 %v372, %v581
  %v583 = vpop.f32.mrb[0].mxu0
  %v584 = vadd.f32 %v368, %v583
  %v585 = vpop.f32.mrb[0].mxu0
  %v586 = vadd.f32 %v372, %v585
  %587 = vmatprep.mubr.bf16.mxu0 %v320
  %588 = vmatmul.mubr.bf16.gmra.mrb[0].mxu0 %v319
  %v589 = vpop.f32.mrb[0].mxu0
  %v590 = vadd.f32 %v368, %v589
  %v591 = vpop.f32.mrb[0].mxu0
  %v592 = vadd.f32 %v372, %v591
  %v593 = vpop.f32.mrb[0].mxu0
  %v594 = vadd.f32 %v368, %v593
  %v595 = vpop.f32.mrb[0].mxu0
  %v596 = vadd.f32 %v372, %v595
  %597 = vmatprep.mubr.bf16.mxu0 %v322
  %598 = vmatmul.mubr.bf16.gmra.mrb[0].mxu0 %v321
  %v599 = vpop.f32.mrb[0].mxu0
  %v600 = vadd.f32 %v368, %v599
  %v601 = vpop.f32.mrb[0].mxu0
  %v602 = vadd.f32 %v372, %v601
  %v603 = vpop.f32.mrb[0].mxu0
  %v604 = vadd.f32 %v368, %v603
  %v605 = vpop.f32.mrb[0].mxu0
  %v606 = vadd.f32 %v372, %v605
  %607 = vmatprep.mubr.bf16.mxu0 %v324
  %608 = vmatmul.mubr.bf16.gmra.mrb[0].mxu0 %v323
  %v609 = vpop.f32.mrb[0].mxu0
  %v610 = vadd.f32 %v368, %v609
  %v611 = vpop.f32.mrb[0].mxu0
  %v612 = vadd.f32 %v372, %v611
  %v613 = vpop.f32.mrb[0].mxu0
  %v614 = vadd.f32 %v368, %v613
  %v615 = vpop.f32.mrb[0].mxu0
  %v616 = vadd.f32 %v372, %v615
  %617 = vmatprep.mubr.bf16.mxu0 %v326
  %618 = vmatmul.mubr.bf16.gmra.mrb[0].mxu0 %v325
  %v619 = vpop.f32.mrb[0].mxu0
  %v620 = vadd.f32 %v368, %v619
  %v621 = vpop.f32.mrb[0].mxu0
  %v622 = vadd.f32 %v372, %v621
  %v623 = vpop.f32.mrb[0].mxu0
  %v624 = vadd.f32 %v368, %v623
  %v625 = vpop.f32.mrb[0].mxu0
  %v626 = vadd.f32 %v372, %v625
  %627 = vmatprep.mubr.bf16.mxu0 %v328
  %628 = vmatmul.mubr.bf16.gmra.mrb[0].mxu0 %v327
  %v629 = vpop.f32.mrb[0].mxu0
  %v630 = vadd.f32 %v368, %v629
  %v631 = vpop.f32.mrb[0].mxu0
  %v632 = vadd.f32 %v372, %v631
  %v633 = vpop.f32.mrb[0].mxu0
  %v634 = vadd.f32 %v368, %v633
  %v635 = vpop.f32.mrb[0].mxu0
  %v636 = vadd.f32 %v372, %v635
  %637 = vmatprep.mubr.bf16.mxu0 %v330
  %638 = vmatmul.mubr.bf16.gmra.mrb[0].mxu0 %v329
  %v639 = vpop.f32.mrb[0].mxu0
  %v640 = vadd.f32 %v368, %v639
  %v641 = vpop.f32.mrb[0].mxu0
  %v642 = vadd.f32 %v372, %v641
  %v643 = vpop.f32.mrb[0].mxu0
  %v644 = vadd.f32 %v368, %v643
  %v645 = vpop.f32.mrb[0].mxu0
  %v646 = vadd.f32 %v372, %v645
  %647 = vdwg.mxu0
  %v648 = vmax.f32 %v570, 0.0
  %v649 = vmax.f32 %v572, 0.0
  %v650 = vmax.f32 %v574, 0.0
  %v651 = vmax.f32 %v576, 0.0
  %v652 = vmax.f32 %v580, 0.0
  %v653 = vmax.f32 %v582, 0.0
  %v654 = vmax.f32 %v584, 0.0
  %v655 = vmax.f32 %v586, 0.0
  %v656 = vmax.f32 %v590, 0.0
  %v657 = vmax.f32 %v592, 0.0
  %v658 = vmax.f32 %v594, 0.0
  %v659 = vmax.f32 %v596, 0.0
  %v660 = vmax.f32 %v600, 0.0
  %v661 = vmax.f32 %v602, 0.0
  %v662 = vmax.f32 %v604, 0.0
  %v663 = vmax.f32 %v606, 0.0
  %v664 = vmax.f32 %v610, 0.0
  %v665 = vmax.f32 %v612, 0.0
  %v666 = vmax.f32 %v614, 0.0
  %v667 = vmax.f32 %v616, 0.0
  %v668 = vmax.f32 %v620, 0.0
  %v669 = vmax.f32 %v622, 0.0
  %v670 = vmax.f32 %v624, 0.0
  %v671 = vmax.f32 %v626, 0.0
  %v672 = vmax.f32 %v630, 0.0
  %v673 = vmax.f32 %v632, 0.0
  %v674 = vmax.f32 %v634, 0.0
  %v675 = vmax.f32 %v636, 0.0
  %v676 = vmax.f32 %v640, 0.0
  %v677 = vmax.f32 %v642, 0.0
  %v678 = vmax.f32 %v644, 0.0
  %v679 = vmax.f32 %v646, 0.0
  %v680 = vld [vmem:[%s5] sm:$0x3]
  %v682 = vlaneseq
  %v683 = vshrl.u32 %v682, 7
  %v684 = vsub.s32 0, %v683
  %v685 = vrot.slane %v680, %v684
  %v686 = vlaneseq
  %v687 = vshrl.u32 %v686, 7
  %v688 = vsub.s32 1, %v687
  %v689 = vrot.slane %v680, %v688
  %v692 = vmul.f32 %v648, %v685
  %v693 = vmul.f32 %v649, %v689
  %v694 = vmul.f32 %v650, %v685
  %v695 = vmul.f32 %v651, %v689
  %v696 = vmul.f32 %v652, %v685
  %v697 = vmul.f32 %v653, %v689
  %v698 = vmul.f32 %v654, %v685
  %v699 = vmul.f32 %v655, %v689
  %v700 = vmul.f32 %v656, %v685
  %v701 = vmul.f32 %v657, %v689
  %v702 = vmul.f32 %v658, %v685
  %v703 = vmul.f32 %v659, %v689
  %v704 = vmul.f32 %v660, %v685
  %v705 = vmul.f32 %v661, %v689
  %v706 = vmul.f32 %v662, %v685
  %v707 = vmul.f32 %v663, %v689
  %v708 = vmul.f32 %v664, %v685
  %v709 = vmul.f32 %v665, %v689
  %v710 = vmul.f32 %v666, %v685
  %v711 = vmul.f32 %v667, %v689
  %v712 = vmul.f32 %v668, %v685
  %v713 = vmul.f32 %v669, %v689
  %v714 = vmul.f32 %v670, %v685
  %v715 = vmul.f32 %v671, %v689
  %v716 = vmul.f32 %v672, %v685
  %v717 = vmul.f32 %v673, %v689
  %v718 = vmul.f32 %v674, %v685
  %v719 = vmul.f32 %v675, %v689
  %v720 = vmul.f32 %v676, %v685
  %v721 = vmul.f32 %v677, %v689
  %v722 = vmul.f32 %v678, %v685
  %v723 = vmul.f32 %v679, %v689
  %v724 = vadd.f32 %v692, %v693
  %725 = vadd.xlane.f32.xlu0 %v724
  %v726 = vpop.xlane.xlu0 %725
  %v727 = vadd.f32 %v694, %v695
  %728 = vadd.xlane.f32.xlu0 %v727
  %v729 = vpop.xlane.xlu0 %728
  %v730 = vadd.f32 %v696, %v697
  %731 = vadd.xlane.f32.xlu0 %v730
  %v732 = vpop.xlane.xlu0 %731
  %v733 = vadd.f32 %v698, %v699
  %734 = vadd.xlane.f32.xlu0 %v733
  %v735 = vpop.xlane.xlu0 %734
  %v736 = vadd.f32 %v700, %v701
  %737 = vadd.xlane.f32.xlu0 %v736
  %v738 = vpop.xlane.xlu0 %737
  %v739 = vadd.f32 %v702, %v703
  %740 = vadd.xlane.f32.xlu0 %v739
  %v741 = vpop.xlane.xlu0 %740
  %v742 = vadd.f32 %v704, %v705
  %743 = vadd.xlane.f32.xlu0 %v742
  %v744 = vpop.xlane.xlu0 %743
  %v745 = vadd.f32 %v706, %v707
  %746 = vadd.xlane.f32.xlu0 %v745
  %v747 = vpop.xlane.xlu0 %746
  %v748 = vadd.f32 %v708, %v709
  %749 = vadd.xlane.f32.xlu0 %v748
  %v750 = vpop.xlane.xlu0 %749
  %v751 = vadd.f32 %v710, %v711
  %752 = vadd.xlane.f32.xlu0 %v751
  %v753 = vpop.xlane.xlu0 %752
  %v754 = vadd.f32 %v712, %v713
  %755 = vadd.xlane.f32.xlu0 %v754
  %v756 = vpop.xlane.xlu0 %755
  %v757 = vadd.f32 %v714, %v715
  %758 = vadd.xlane.f32.xlu0 %v757
  %v759 = vpop.xlane.xlu0 %758
  %v760 = vadd.f32 %v716, %v717
  %761 = vadd.xlane.f32.xlu0 %v760
  %v762 = vpop.xlane.xlu0 %761
  %v763 = vadd.f32 %v718, %v719
  %764 = vadd.xlane.f32.xlu0 %v763
  %v765 = vpop.xlane.xlu0 %764
  %v766 = vadd.f32 %v720, %v721
  %767 = vadd.xlane.f32.xlu0 %v766
  %v768 = vpop.xlane.xlu0 %767
  %v769 = vadd.f32 %v722, %v723
  %770 = vadd.xlane.f32.xlu0 %v769
  %v771 = vpop.xlane.xlu0 %770
  %v772 = vld [vmem:[#allocation2] sm:$0x1]
  %v774 = vlaneseq
  %v775 = vshrl.u32 %v774, 7
  %v776 = vsub.s32 0, %v775
  %v777 = vrot.slane %v772, %v776
  %v779 = vadd.f32 %v726, %v777
  %v780 = vadd.f32 %v729, %v777
  %v781 = vadd.f32 %v732, %v777
  %v782 = vadd.f32 %v735, %v777
  %v783 = vadd.f32 %v738, %v777
  %v784 = vadd.f32 %v741, %v777
  %v785 = vadd.f32 %v744, %v777
  %v786 = vadd.f32 %v747, %v777
  %v787 = vadd.f32 %v750, %v777
  %v788 = vadd.f32 %v753, %v777
  %v789 = vadd.f32 %v756, %v777
  %v790 = vadd.f32 %v759, %v777
  %v791 = vadd.f32 %v762, %v777
  %v792 = vadd.f32 %v765, %v777
  %v793 = vadd.f32 %v768, %v777
  %v794 = vadd.f32 %v771, %v777
  %vm795 = vcmask 7168
  %796 = vst.msk [vmem:[%s7] sm:$0xff] %vm795, %v779
  %797 = vst.msk [vmem:[%s7 + $0x8] sm:$0xff] %vm795, %v780
  %798 = vst.msk [vmem:[%s7 + $0x10] sm:$0xff] %vm795, %v781
  %799 = vst.msk [vmem:[%s7 + $0x18] sm:$0xff] %vm795, %v782
  %800 = vst.msk [vmem:[%s7 + $0x20] sm:$0xff] %vm795, %v783
  %801 = vst.msk [vmem:[%s7 + $0x28] sm:$0xff] %vm795, %v784
  %802 = vst.msk [vmem:[%s7 + $0x30] sm:$0xff] %vm795, %v785
  %803 = vst.msk [vmem:[%s7 + $0x38] sm:$0xff] %vm795, %v786
  %804 = vst.msk [vmem:[%s7 + $0x40] sm:$0xff] %vm795, %v787
  %805 = vst.msk [vmem:[%s7 + $0x48] sm:$0xff] %vm795, %v788
  %806 = vst.msk [vmem:[%s7 + $0x50] sm:$0xff] %vm795, %v789
  %807 = vst.msk [vmem:[%s7 + $0x58] sm:$0xff] %vm795, %v790
  %808 = vst.msk [vmem:[%s7 + $0x60] sm:$0xff] %vm795, %v791
  %809 = vst.msk [vmem:[%s7 + $0x68] sm:$0xff] %vm795, %v792
  %810 = vst.msk [vmem:[%s7 + $0x70] sm:$0xff] %vm795, %v793
  %811 = vst.msk [vmem:[%s7 + $0x78] sm:$0xff] %vm795, %v794
  // Predicated region
  $region30: #{critic_forward.1} parent=0 // pred_check
    _
  $region31: #{critic_forward.1} parent=0 // pred_check_branch
    %813 = sbr.rel (0) target = $region33
  $region32: #{critic_forward.1} parent=0 // pred_region
    _
  $region33: #{critic_forward.1} parent=0 // pred_fallthru
    _
  // Predicated region
  $region34: #{critic_forward.1} parent=0 // pred_check
    _
  $region35: #{critic_forward.1} parent=0 // pred_check_branch
    %815 = sbr.rel (0) target = $region37
  $region36: #{critic_forward.1} parent=0 // pred_region
    _
  $region37: #{critic_forward.1} parent=0 // pred_fallthru
    _

</llo_original>
